<compile_context>
chip_gen: v6e
topology: v6e:2x2x1
jax: 0.10.0
libtpu: 0.0.40
codegen_flags: <defaults>
</compile_context>

<pallas_src>
import math

import jax
import jax.numpy as jnp
from jax.experimental import pallas as pl
from jax.experimental.pallas import tpu as pltpu


def _linear_embedding_kernel(x_ref, w_ref, o_ref):
    # x_ref: (tm, d_input) row tile; w_ref: (d_input, tn); o_ref: (tm, tn).
    # MXU matmul in the operand dtype (bf16 recommended for production) with an
    # f32 accumulator.
    o_ref[...] = jnp.dot(
        x_ref[...], w_ref[...], preferred_element_type=jnp.float32
    ).astype(o_ref.dtype)


def _vmem_budget_bytes():
    """Generation-aware VMEM budget with headroom for compiler scratch."""
    try:
        cap = pltpu.get_tpu_info().vmem_capacity_bytes
    except Exception:
        cap = 64 * 1024 * 1024  # conservative fallback (v7x per-TC VMEM)
    return (cap // 8) * 7  # leave ~12.5% headroom


def linear_embedding(x, weight, *, max_block_rows=4096):
    """Pallas forward of LinearEmbedding: x @ weight.

    x: (..., d_input); weight: (d_input, d_model).  Works for f32 or bf16
    operands (bf16 end-to-end recommended for production: halves HBM bytes and
    uses the native bf16 MXU).  Returns (..., d_model) in the promoted dtype.
    """
    *lead, d_input = x.shape
    d_in_w, d_model = weight.shape
    assert d_input == d_in_w, "weight/input feature mismatch"

    out_dtype = jnp.result_type(x.dtype, weight.dtype)

    M = math.prod(lead) if lead else 1
    if M == 0:  # degenerate leading dim: nothing to compute
        return jnp.zeros((*lead, d_model), dtype=out_dtype)

    x2 = x.reshape(M, d_input)
    bx = x2.dtype.itemsize
    bw = weight.dtype.itemsize
    bo = jnp.dtype(out_dtype).itemsize

    budget = _vmem_budget_bytes()

    # ---- N (d_model) tiling: only when the resident weight slab is too big ----
    w_resident = d_input * d_model * bw  # single-buffered resident weight
    n_tiled = d_model >= 256 and w_resident > budget // 4
    if n_tiled:
        # Two weight buffers of (d_input, tn) should fit in ~1/4 of the budget.
        tn = ((budget // 4) // max(2 * d_input * bw, 1)) // 128 * 128
        tn = max(128, min(tn, (d_model // 128) * 128))
    else:
        tn = d_model

    # ---- Row tile tm from the VMEM budget -------------------------------------
    w_bufs = 2 if n_tiled else 1  # single-buffered when grid-invariant
    fixed = w_bufs * d_input * tn * bw
    per_row = 2 * (d_input * bx + tn * bo)  # double-buffered x and out tiles
    tm_budget = max(8, (budget - fixed) // max(per_row, 1))

    if M <= min(tm_budget, max_block_rows):
        tm = M  # single row tile, full extent (always layout-legal)
    else:
        tm = min(tm_budget, max_block_rows)
        if tm >= 256:
            tm = (tm // 256) * 256  # MXU row granularity
        else:
            tm = max(8, (tm // 8) * 8)  # sublane granularity

    grid_m = pl.cdiv(M, tm)
    grid_n = pl.cdiv(d_model, tn)

    cost = pl.CostEstimate(
        flops=2 * M * d_input * d_model,
        transcendentals=0,
        bytes_accessed=M * d_input * bx + d_input * d_model * bw + M * d_model * bo,
    )

    if n_tiled:
        grid = (grid_m, grid_n)
        x_spec = pl.BlockSpec((tm, d_input), lambda i, j: (i, 0))
        o_spec = pl.BlockSpec((tm, tn), lambda i, j: (i, j))
        semantics = ("parallel", "parallel")
    else:
        grid = (grid_m,)
        x_spec = pl.BlockSpec((tm, d_input), lambda i: (i, 0))
        o_spec = pl.BlockSpec((tm, d_model), lambda i: (i, 0))
        semantics = ("parallel",)

    def _build(in_specs):
        return pl.pallas_call(
            _linear_embedding_kernel,
            out_shape=jax.ShapeDtypeStruct((M, d_model), out_dtype),
            grid_spec=pltpu.PrefetchScalarGridSpec(
                num_scalar_prefetch=0,
                grid=grid,
                in_specs=in_specs,
                out_specs=o_spec,
            ),
            compiler_params=pltpu.CompilerParams(
                dimension_semantics=semantics,
                vmem_limit_bytes=budget,
            ),
            cost_estimate=cost,
        )

    if n_tiled:
        # Weight block varies with j -> keep default double buffering.
        w_spec = pl.BlockSpec((d_input, tn), lambda i, j: (0, j))
        out = _build([x_spec, w_spec])(x2, weight)
    else:
        # Grid-invariant weight: fetched once; single-buffer it to free VMEM.
        try:
            w_spec = pl.BlockSpec(
                (d_input, d_model), lambda i: (0, 0), pipeline_mode=pl.Buffered(1)
            )
            out = _build([x_spec, w_spec])(x2, weight)
        except Exception:
            # Fallback for jax versions without pipeline_mode support.
            w_spec = pl.BlockSpec((d_input, d_model), lambda i: (0, 0))
            out = _build([x_spec, w_spec])(x2, weight)

    return out.reshape(*lead, d_model)


# ---------------- pure-JAX reference (mirrors the PyTorch forward) ----------------
def reference_linear_embedding(x, weight):
    return x @ weight


if __name__ == "__main__":
    # Shapes implied by the module: x (batch, seq, d_input), weight (d_input, d_model).
    B, S, d_input, d_model = 2, 8, 16, 32

    key = jax.random.PRNGKey(0)
    k_w, k_x = jax.random.split(key)

    # Parameter(torch.rand(d_input, d_model)) -> uniform [0, 1)
    weight = jax.random.uniform(k_w, (d_input, d_model), dtype=jnp.float32)
    x = jax.random.normal(k_x, (B, S, d_input), dtype=jnp.float32)

    # 1) f32 path (matches the PyTorch module's default dtype).
    out = jax.block_until_ready(linear_embedding(x, weight))
    ref = reference_linear_embedding(x, weight)
    assert out.shape == (B, S, d_model)
    assert jnp.allclose(out, ref, atol=1e-5, rtol=1e-5), "f32 mismatch vs reference"

    # 2) bf16 end-to-end path (production recommendation: halves HBM bytes,
    #    native bf16 MXU operands, f32 accumulation -> ~3 decimal-digit operands).
    x_bf, w_bf = x.astype(jnp.bfloat16), weight.astype(jnp.bfloat16)
    out_bf = jax.block_until_ready(linear_embedding(x_bf, w_bf))
    ref_bf = reference_linear_embedding(
        x_bf.astype(jnp.float32), w_bf.astype(jnp.float32)
    )
    assert out_bf.dtype == jnp.bfloat16
    assert jnp.allclose(out_bf.astype(jnp.float32), ref_bf, atol=5e-2, rtol=5e-2), (
        "bf16 mismatch vs reference"
    )

    # 3) Multi-tile ragged path (grid = cdiv, no wrapper pad/slice): 300 rows, tm=128.
    x3 = jax.random.normal(jax.random.PRNGKey(1), (3, 100, d_input), dtype=jnp.float32)
    out3 = jax.block_until_ready(linear_embedding(x3, weight, max_block_rows=128))
    ref3 = reference_linear_embedding(x3, weight)
    assert out3.shape == (3, 100, d_model)
    assert jnp.allclose(out3, ref3, atol=1e-5, rtol=1e-5), "ragged-tile mismatch"

    print("KERNEL_OK")
</pallas_src>

<mosaic_0001>
module attributes {stable_mosaic.version = 11 : i64} {
  func.func @_linear_embedding_kernel(%arg0: i32, %arg1: memref<16x16xf32, #tpu.memory_space<vmem>>, %arg2: memref<16x32xf32, #tpu.memory_space<vmem>>, %arg3: memref<16x32xf32, #tpu.memory_space<vmem>>) attributes {dimension_semantics = [#tpu.dimension_semantics<parallel>], iteration_bounds = array<i64: 1>, scalar_prefetch = 0 : i64, scratch_operands = 0 : i64, tpu.core_type = #tpu.core_type<tc>, window_params = [{transform_indices = @transform_0, window_bounds = array<i64: 16, 16>}, {pipeline_mode = #tpu.pipeline_mode<synchronous>, transform_indices = @transform_1, window_bounds = array<i64: 16, 32>}, {transform_indices = @transform_2, window_bounds = array<i64: 16, 32>}]} {
    %c0 = arith.constant 0 : index
    %c0_0 = arith.constant 0 : index
    %0 = vector.load %arg1[%c0, %c0_0] : memref<16x16xf32, #tpu.memory_space<vmem>>, vector<16x16xf32>
    %c0_1 = arith.constant 0 : index
    %c0_2 = arith.constant 0 : index
    %1 = vector.load %arg2[%c0_1, %c0_2] : memref<16x32xf32, #tpu.memory_space<vmem>>, vector<16x32xf32>
    %cst = arith.constant dense<0.000000e+00> : vector<16x32xf32>
    %2 = tpu.matmul %0, %1, %cst {dimension_numbers = #tpu.dot_dimension_numbers<[1], [0], [0], [1], [0, 0, 1, 1], [], []>} : vector<16x16xf32>, vector<16x32xf32>, vector<16x32xf32> -> vector<16x32xf32>
    %c0_3 = arith.constant 0 : index
    %c0_4 = arith.constant 0 : index
    %3 = vector.load %arg3[%c0_3, %c0_4] : memref<16x32xf32, #tpu.memory_space<vmem>>, vector<16x32xf32>
    tpu.vector_store %arg3[%c0_3, %c0_4], %2 {strides = array<i32>} : memref<16x32xf32, #tpu.memory_space<vmem>>, vector<16x32xf32>,
    return
  }
  func.func @transform_0(%arg0: i32) -> (i32, i32) {
    %c0_i32 = arith.constant 0 : i32
    %c0_i32_0 = arith.constant 0 : i32
    return %arg0, %c0_i32 : i32, i32
  }
  func.func @transform_1(%arg0: i32) -> (i32, i32) {
    %c0_i32 = arith.constant 0 : i32
    %c0_i32_0 = arith.constant 0 : i32
    %c0_i32_1 = arith.constant 0 : i32
    return %c0_i32, %c0_i32_0 : i32, i32
  }
  func.func @transform_2(%arg0: i32) -> (i32, i32) {
    %c0_i32 = arith.constant 0 : i32
    %c0_i32_0 = arith.constant 0 : i32
    return %arg0, %c0_i32 : i32, i32
  }
}

module attributes {stable_mosaic.version = 11 : i64} {
  func.func @_linear_embedding_kernel(%arg0: i32, %arg1: memref<16x16xf32, #tpu.memory_space<vmem>>, %arg2: memref<16x32xf32, #tpu.memory_space<vmem>>, %arg3: memref<16x32xf32, #tpu.memory_space<vmem>>) attributes {dimension_semantics = [#tpu.dimension_semantics<parallel>], iteration_bounds = array<i64: 1>, scalar_prefetch = 0 : i64, scratch_operands = 0 : i64, tpu.core_type = #tpu.core_type<tc>, window_params = [{transform_indices = @transform_0, window_bounds = array<i64: 16, 16>}, {pipeline_mode = #tpu.pipeline_mode<synchronous>, transform_indices = @transform_1, window_bounds = array<i64: 16, 32>}, {transform_indices = @transform_2, window_bounds = array<i64: 16, 32>}]} {
    %c0 = arith.constant 0 : index
    %c0_0 = arith.constant 0 : index
    %0 = vector.load %arg1[%c0, %c0_0] : memref<16x16xf32, #tpu.memory_space<vmem>>, vector<16x16xf32>
    %c0_1 = arith.constant 0 : index
    %c0_2 = arith.constant 0 : index
    %1 = vector.load %arg2[%c0_1, %c0_2] : memref<16x32xf32, #tpu.memory_space<vmem>>, vector<16x32xf32>
    %cst = arith.constant dense<0.000000e+00> : vector<16x32xf32>
    %2 = tpu.matmul %0, %1, %cst {dimension_numbers = #tpu.dot_dimension_numbers<[1], [0], [0], [1], [0, 0, 1, 1], [], []>} : vector<16x16xf32>, vector<16x32xf32>, vector<16x32xf32> -> vector<16x32xf32>
    %c0_3 = arith.constant 0 : index
    %c0_4 = arith.constant 0 : index
    %3 = vector.load %arg3[%c0_3, %c0_4] : memref<16x32xf32, #tpu.memory_space<vmem>>, vector<16x32xf32>
    tpu.vector_store %arg3[%c0_3, %c0_4], %2 {strides = array<i32>} : memref<16x32xf32, #tpu.memory_space<vmem>>, vector<16x32xf32>,
    return
  }
  func.func @transform_0(%arg0: i32) -> (i32, i32) {
    %c0_i32 = arith.constant 0 : i32
    %c0_i32_0 = arith.constant 0 : i32
    return %arg0, %c0_i32 : i32, i32
  }
  func.func @transform_1(%arg0: i32) -> (i32, i32) {
    %c0_i32 = arith.constant 0 : i32
    %c0_i32_0 = arith.constant 0 : i32
    %c0_i32_1 = arith.constant 0 : i32
    return %c0_i32, %c0_i32_0 : i32, i32
  }
  func.func @transform_2(%arg0: i32) -> (i32, i32) {
    %c0_i32 = arith.constant 0 : i32
    %c0_i32_0 = arith.constant 0 : i32
    return %arg0, %c0_i32 : i32, i32
  }
}

</mosaic_0001>

<llo_original>
// kernel: tpu_custom_call.1
$region0: #{tpu_custom_call.1}
  #allocation0 [shape = 'u32[]', space=smem, size = 0x4, offset = 0x4, fixed_abs, tag = 'smem constant byte address 0x4 - core index']
  #allocation1 [shape = 'u32[144,128]{1,0:T(1,128)}', space=vmem, size = 0x12000, scoped, tag = 'internal scratch']
  %s0 = inlined_call_operand.hbm [shape: f32[16,16], index: 0, kind: input, shape index: {}]
  %s1 = inlined_call_operand.hbm [shape: f32[16,32], index: 1, kind: input, shape index: {}]
  %s2 = inlined_call_operand.hbm [shape: f32[16,32], index: 2, kind: output, shape index: {}]
  %s3 = sld [smem:[#allocation0]]
  $region26: #{tpu_custom_call.1} parent=0
    _
  %s5 = ssub.s32 1, %s3
  %s6 = scalar_select 0, %s5, %s3
  $region1: #{tpu_custom_call.1} parent=0
    #allocation2 [shape = 'u8[8192]{0}', space=vmem, size = 0x2000, scoped, tag = 'input window, operand 0, single buffered']
    #allocation3 [shape = 's32[1]{0}', space=sflag, size = 0x4, scoped, tag = 'scoped memory for tpu_custom_call.1']
    #allocation4 [shape = 's32[1]{0}', space=sflag, size = 0x4, scoped, tag = 'scoped memory for tpu_custom_call.1']
    #allocation5 [shape = 'u8[8192]{0}', space=vmem, size = 0x2000, scoped, tag = 'input window, operand 1, single buffered']
    #allocation6 [shape = 's32[1]{0}', space=sflag, size = 0x4, scoped, tag = 'scoped memory for tpu_custom_call.1']
    #allocation7 [shape = 'u8[8192]{0}', space=vmem, size = 0x2000, scoped, tag = 'output window, operand 0, single buffered']
    %7 = vsyncpa [#allocation3], 0
    %8 = vsyncpa [#allocation6], 0
    %9 = vsyncpa [#allocation4], 0
    // Predicated region
    $region2: #{tpu_custom_call.1} parent=1 // pred_check
      _
    $region3: #{tpu_custom_call.1} parent=1 // pred_check_branch
      %11 = sbr.rel (0) target = $region5
    $region4: #{tpu_custom_call.1} parent=1 // pred_region
      %s13 = ssub.s32 256, 256
      %14 = vsyncadd [#allocation3], %s13
      %s15 = sshll.u32 [#allocation2], 4
      %s16 = int_to_ptr.vmem [resolvable:$true] %s15
      %21 = dma.hbm_to_vmem [thread:$0]  %s0, 256, %s16, [#allocation3], 128, 128, 8
    $region5: #{tpu_custom_call.1} parent=1 // pred_fallthru
      _
    // Predicated region
    $region6: #{tpu_custom_call.1} parent=1 // pred_check
      _
    $region7: #{tpu_custom_call.1} parent=1 // pred_check_branch
      %23 = sbr.rel (0) target = $region9
    $region8: #{tpu_custom_call.1} parent=1 // pred_region
      %s25 = ssub.s32 256, 256
      %26 = vsyncadd [#allocation6], %s25
      %s27 = sshll.u32 [#allocation5], 4
      %s28 = int_to_ptr.vmem [resolvable:$true] %s27
      %33 = dma.hbm_to_vmem [thread:$0]  %s1, 256, %s28, [#allocation6], 128, 128, 8
    $region9: #{tpu_custom_call.1} parent=1 // pred_fallthru
      _
    // Predicated region
    $region10: #{tpu_custom_call.1} parent=1 // pred_check
      _
    $region11: #{tpu_custom_call.1} parent=1 // pred_check_branch
      %35 = sbr.rel (0) target = $region13
    $region12: #{tpu_custom_call.1} parent=1 // pred_region
      %36 = dma.done [#allocation3], 256
    $region13: #{tpu_custom_call.1} parent=1 // pred_fallthru
      _
    // Predicated region
    $region14: #{tpu_custom_call.1} parent=1 // pred_check
      _
    $region15: #{tpu_custom_call.1} parent=1 // pred_check_branch
      %38 = sbr.rel (0) target = $region17
    $region16: #{tpu_custom_call.1} parent=1 // pred_region
      %39 = dma.done [#allocation6], 256
    $region17: #{tpu_custom_call.1} parent=1 // pred_fallthru
      _
    %v40 = vld [vmem:[#allocation2] sm:$0xff]
    %v41 = vld [vmem:[#allocation2 + $0x8] sm:$0xff]
    %v42 = vld [vmem:[#allocation5] sm:$0xff]
    %v43 = vld [vmem:[#allocation5 + $0x8] sm:$0xff]
    %vm44 = vcmask 130048
    %v46 = vsel %vm44, %v40, 0
    %v49 = vsel %vm44, %v41, 0
    %51 = vmatprep.subr.mxu0 0.0
    %52 = vmatpush1.msra.mxu0 0.0
    %53 = vmatprep.subr.mxu0 0.0
    %54 = vmatpush1.msra.mxu0 0.0
    %55 = vmatprep.subr.mxu0 0.0
    %56 = vmatpush1.msra.mxu0 0.0
    %57 = vmatprep.subr.mxu0 0.0
    %58 = vmatpush1.msra.mxu0 0.0
    %59 = vmatprep.subr.mxu0 0.0
    %60 = vmatpush1.msra.mxu0 0.0
    %61 = vmatprep.subr.mxu0 0.0
    %62 = vmatpush1.msra.mxu0 0.0
    %63 = vmatprep.subr.mxu0 0.0
    %64 = vmatpush1.msra.mxu0 0.0
    %65 = vmatprep.subr.mxu0 0.0
    %66 = vmatpush1.msra.mxu0 0.0
    %67 = vmatprep.subr.mxu0 0.0
    %68 = vmatpush1.msra.mxu0 0.0
    %69 = vmatprep.subr.mxu0 0.0
    %70 = vmatpush1.msra.mxu0 0.0
    %71 = vmatprep.subr.mxu0 0.0
    %72 = vmatpush1.msra.mxu0 0.0
    %73 = vmatprep.subr.mxu0 0.0
    %74 = vmatpush1.msra.mxu0 0.0
    %75 = vmatprep.subr.mxu0 0.0
    %76 = vmatpush1.msra.mxu0 0.0
    %77 = vmatprep.subr.mxu0 0.0
    %78 = vmatpush1.msra.mxu0 0.0
    %79 = vmatprep.subr.mxu0 0.0
    %80 = vmatpush1.msra.mxu0 %v43
    %81 = vmatprep.subr.mxu0 0.0
    %82 = vmatpush1.msra.mxu0 %v42
    %83 = vmatprep.subr.mxu0 0.0
    %84 = vmatpush2.msra.mxu0 0.0
    %85 = vmatprep.subr.mxu0 0.0
    %86 = vmatpush2.msra.mxu0 0.0
    %87 = vmatprep.subr.mxu0 0.0
    %88 = vmatpush2.msra.mxu0 0.0
    %89 = vmatprep.subr.mxu0 0.0
    %90 = vmatpush2.msra.mxu0 0.0
    %91 = vmatprep.subr.mxu0 0.0
    %92 = vmatpush2.msra.mxu0 0.0
    %93 = vmatprep.subr.mxu0 0.0
    %94 = vmatpush2.msra.mxu0 0.0
    %95 = vmatprep.subr.mxu0 0.0
    %96 = vmatpush2.msra.mxu0 0.0
    %97 = vmatprep.subr.mxu0 0.0
    %98 = vmatpush2.msra.mxu0 0.0
    %99 = vmatprep.subr.mxu0 0.0
    %100 = vmatpush2.msra.mxu0 0.0
    %101 = vmatprep.subr.mxu0 0.0
    %102 = vmatpush2.msra.mxu0 0.0
    %103 = vmatprep.subr.mxu0 0.0
    %104 = vmatpush2.msra.mxu0 0.0
    %105 = vmatprep.subr.mxu0 0.0
    %106 = vmatpush2.msra.mxu0 0.0
    %107 = vmatprep.subr.mxu0 0.0
    %108 = vmatpush2.msra.mxu0 0.0
    %109 = vmatprep.subr.mxu0 0.0
    %110 = vmatpush2.msra.mxu0 0.0
    %111 = vmatprep.subr.mxu0 0.0
    %112 = vmatpush2.msra.mxu0 0.0
    %113 = vmatprep.subr.mxu0 0.0
    %114 = vmatpush2.msra.mxu0 0.0
    %115 = vmatprep.mubr.f32.mxu0 0.0
    %116 = vmatmul.mubr.f32.gmra.mxu0 %v46
    %v117 = vpop.f32.mrf.mxu0
    %v118 = vadd.f32 0.0, %v117
    %v119 = vpop.f32.mrf.mxu0
    %120 = vmatprep.mubr.f32.mxu0 0.0
    %121 = vmatmul.mubr.f32.gmra.mxu0 %v49
    %v122 = vpop.f32.mrf.mxu0
    %v123 = vadd.f32 0.0, %v122
    %v124 = vpop.f32.mrf.mxu0
    %125 = vdwg.mxu0
    %vm126 = vcmask 261120
    %127 = vst.msk [vmem:[#allocation7] sm:$0xff] %vm126, %v118
    %128 = vst.msk [vmem:[#allocation7 + $0x8] sm:$0xff] %vm126, %v123
    // Predicated region
    $region18: #{tpu_custom_call.1} parent=1 // pred_check
      _
    $region19: #{tpu_custom_call.1} parent=1 // pred_check_branch
      %130 = sbr.rel (0) target = $region21
    $region20: #{tpu_custom_call.1} parent=1 // pred_region
      %s132 = ssub.s32 256, 256
      %133 = vsyncadd [#allocation4], %s132
      %s134 = sshll.u32 [#allocation7], 4
      %s135 = int_to_ptr.vmem [resolvable:$true] %s134
      %140 = dma.vmem_to_hbm [thread:$0]  %s135, 256, %s2, [#allocation4], 128, 128, 8
    $region21: #{tpu_custom_call.1} parent=1 // pred_fallthru
      _
    // Predicated region
    $region22: #{tpu_custom_call.1} parent=1 // pred_check
      _
    $region23: #{tpu_custom_call.1} parent=1 // pred_check_branch
      %142 = sbr.rel (0) target = $region25
    $region24: #{tpu_custom_call.1} parent=1 // pred_region
      %143 = dma.done [#allocation4], 256
    $region25: #{tpu_custom_call.1} parent=1 // pred_fallthru
      _
    %144 = vsyncpa [#allocation3], 1
    %145 = vsyncpa [#allocation6], 1
    %146 = vsyncpa [#allocation4], 1

// kernel: tpu_custom_call.1
$region0: #{tpu_custom_call.1}
  #allocation0 [shape = 'u32[]', space=smem, size = 0x4, offset = 0x4, fixed_abs, tag = 'smem constant byte address 0x4 - core index']
  #allocation1 [shape = 'u32[144,128]{1,0:T(1,128)}', space=vmem, size = 0x12000, scoped, tag = 'internal scratch']
  %s0 = inlined_call_operand.hbm [shape: f32[16,16], index: 0, kind: input, shape index: {}]
  %s1 = inlined_call_operand.hbm [shape: f32[16,32], index: 1, kind: input, shape index: {}]
  %s2 = inlined_call_operand.hbm [shape: f32[16,32], index: 2, kind: output, shape index: {}]
  %s3 = sld [smem:[#allocation0]]
  $region26: #{tpu_custom_call.1} parent=0
    _
  %s5 = ssub.s32 1, %s3
  %s6 = scalar_select 0, %s5, %s3
  $region1: #{tpu_custom_call.1} parent=0
    #allocation2 [shape = 'u8[8192]{0}', space=vmem, size = 0x2000, scoped, tag = 'input window, operand 0, single buffered']
    #allocation3 [shape = 's32[1]{0}', space=sflag, size = 0x4, scoped, tag = 'scoped memory for tpu_custom_call.1']
    #allocation4 [shape = 's32[1]{0}', space=sflag, size = 0x4, scoped, tag = 'scoped memory for tpu_custom_call.1']
    #allocation5 [shape = 'u8[8192]{0}', space=vmem, size = 0x2000, scoped, tag = 'input window, operand 1, single buffered']
    #allocation6 [shape = 's32[1]{0}', space=sflag, size = 0x4, scoped, tag = 'scoped memory for tpu_custom_call.1']
    #allocation7 [shape = 'u8[8192]{0}', space=vmem, size = 0x2000, scoped, tag = 'output window, operand 0, single buffered']
    %7 = vsyncpa [#allocation3], 0
    %8 = vsyncpa [#allocation6], 0
    %9 = vsyncpa [#allocation4], 0
    // Predicated region
    $region2: #{tpu_custom_call.1} parent=1 // pred_check
      _
    $region3: #{tpu_custom_call.1} parent=1 // pred_check_branch
      %11 = sbr.rel (0) target = $region5
    $region4: #{tpu_custom_call.1} parent=1 // pred_region
      %s13 = ssub.s32 256, 256
      %14 = vsyncadd [#allocation3], %s13
      %s15 = sshll.u32 [#allocation2], 4
      %s16 = int_to_ptr.vmem [resolvable:$true] %s15
      %21 = dma.hbm_to_vmem [thread:$0]  %s0, 256, %s16, [#allocation3], 128, 128, 8
    $region5: #{tpu_custom_call.1} parent=1 // pred_fallthru
      _
    // Predicated region
    $region6: #{tpu_custom_call.1} parent=1 // pred_check
      _
    $region7: #{tpu_custom_call.1} parent=1 // pred_check_branch
      %23 = sbr.rel (0) target = $region9
    $region8: #{tpu_custom_call.1} parent=1 // pred_region
      %s25 = ssub.s32 256, 256
      %26 = vsyncadd [#allocation6], %s25
      %s27 = sshll.u32 [#allocation5], 4
      %s28 = int_to_ptr.vmem [resolvable:$true] %s27
      %33 = dma.hbm_to_vmem [thread:$0]  %s1, 256, %s28, [#allocation6], 128, 128, 8
    $region9: #{tpu_custom_call.1} parent=1 // pred_fallthru
      _
    // Predicated region
    $region10: #{tpu_custom_call.1} parent=1 // pred_check
      _
    $region11: #{tpu_custom_call.1} parent=1 // pred_check_branch
      %35 = sbr.rel (0) target = $region13
    $region12: #{tpu_custom_call.1} parent=1 // pred_region
      %36 = dma.done [#allocation3], 256
    $region13: #{tpu_custom_call.1} parent=1 // pred_fallthru
      _
    // Predicated region
    $region14: #{tpu_custom_call.1} parent=1 // pred_check
      _
    $region15: #{tpu_custom_call.1} parent=1 // pred_check_branch
      %38 = sbr.rel (0) target = $region17
    $region16: #{tpu_custom_call.1} parent=1 // pred_region
      %39 = dma.done [#allocation6], 256
    $region17: #{tpu_custom_call.1} parent=1 // pred_fallthru
      _
    %v40 = vld [vmem:[#allocation2] sm:$0xff]
    %v41 = vld [vmem:[#allocation2 + $0x8] sm:$0xff]
    %v42 = vld [vmem:[#allocation5] sm:$0xff]
    %v43 = vld [vmem:[#allocation5 + $0x8] sm:$0xff]
    %vm44 = vcmask 130048
    %v46 = vsel %vm44, %v40, 0
    %v49 = vsel %vm44, %v41, 0
    %51 = vmatprep.subr.mxu0 0.0
    %52 = vmatpush1.msra.mxu0 0.0
    %53 = vmatprep.subr.mxu0 0.0
    %54 = vmatpush1.msra.mxu0 0.0
    %55 = vmatprep.subr.mxu0 0.0
    %56 = vmatpush1.msra.mxu0 0.0
    %57 = vmatprep.subr.mxu0 0.0
    %58 = vmatpush1.msra.mxu0 0.0
    %59 = vmatprep.subr.mxu0 0.0
    %60 = vmatpush1.msra.mxu0 0.0
    %61 = vmatprep.subr.mxu0 0.0
    %62 = vmatpush1.msra.mxu0 0.0
    %63 = vmatprep.subr.mxu0 0.0
    %64 = vmatpush1.msra.mxu0 0.0
    %65 = vmatprep.subr.mxu0 0.0
    %66 = vmatpush1.msra.mxu0 0.0
    %67 = vmatprep.subr.mxu0 0.0
    %68 = vmatpush1.msra.mxu0 0.0
    %69 = vmatprep.subr.mxu0 0.0
    %70 = vmatpush1.msra.mxu0 0.0
    %71 = vmatprep.subr.mxu0 0.0
    %72 = vmatpush1.msra.mxu0 0.0
    %73 = vmatprep.subr.mxu0 0.0
    %74 = vmatpush1.msra.mxu0 0.0
    %75 = vmatprep.subr.mxu0 0.0
    %76 = vmatpush1.msra.mxu0 0.0
    %77 = vmatprep.subr.mxu0 0.0
    %78 = vmatpush1.msra.mxu0 0.0
    %79 = vmatprep.subr.mxu0 0.0
    %80 = vmatpush1.msra.mxu0 %v43
    %81 = vmatprep.subr.mxu0 0.0
    %82 = vmatpush1.msra.mxu0 %v42
    %83 = vmatprep.subr.mxu0 0.0
    %84 = vmatpush2.msra.mxu0 0.0
    %85 = vmatprep.subr.mxu0 0.0
    %86 = vmatpush2.msra.mxu0 0.0
    %87 = vmatprep.subr.mxu0 0.0
    %88 = vmatpush2.msra.mxu0 0.0
    %89 = vmatprep.subr.mxu0 0.0
    %90 = vmatpush2.msra.mxu0 0.0
    %91 = vmatprep.subr.mxu0 0.0
    %92 = vmatpush2.msra.mxu0 0.0
    %93 = vmatprep.subr.mxu0 0.0
    %94 = vmatpush2.msra.mxu0 0.0
    %95 = vmatprep.subr.mxu0 0.0
    %96 = vmatpush2.msra.mxu0 0.0
    %97 = vmatprep.subr.mxu0 0.0
    %98 = vmatpush2.msra.mxu0 0.0
    %99 = vmatprep.subr.mxu0 0.0
    %100 = vmatpush2.msra.mxu0 0.0
    %101 = vmatprep.subr.mxu0 0.0
    %102 = vmatpush2.msra.mxu0 0.0
    %103 = vmatprep.subr.mxu0 0.0
    %104 = vmatpush2.msra.mxu0 0.0
    %105 = vmatprep.subr.mxu0 0.0
    %106 = vmatpush2.msra.mxu0 0.0
    %107 = vmatprep.subr.mxu0 0.0
    %108 = vmatpush2.msra.mxu0 0.0
    %109 = vmatprep.subr.mxu0 0.0
    %110 = vmatpush2.msra.mxu0 0.0
    %111 = vmatprep.subr.mxu0 0.0
    %112 = vmatpush2.msra.mxu0 0.0
    %113 = vmatprep.subr.mxu0 0.0
    %114 = vmatpush2.msra.mxu0 0.0
    %115 = vmatprep.mubr.f32.mxu0 0.0
    %116 = vmatmul.mubr.f32.gmra.mxu0 %v46
    %v117 = vpop.f32.mrf.mxu0
    %v118 = vadd.f32 0.0, %v117
    %v119 = vpop.f32.mrf.mxu0
    %120 = vmatprep.mubr.f32.mxu0 0.0
    %121 = vmatmul.mubr.f32.gmra.mxu0 %v49
    %v122 = vpop.f32.mrf.mxu0
    %v123 = vadd.f32 0.0, %v122
    %v124 = vpop.f32.mrf.mxu0
    %125 = vdwg.mxu0
    %vm126 = vcmask 261120
    %127 = vst.msk [vmem:[#allocation7] sm:$0xff] %vm126, %v118
    %128 = vst.msk [vmem:[#allocation7 + $0x8] sm:$0xff] %vm126, %v123
    // Predicated region
    $region18: #{tpu_custom_call.1} parent=1 // pred_check
      _
    $region19: #{tpu_custom_call.1} parent=1 // pred_check_branch
      %130 = sbr.rel (0) target = $region21
    $region20: #{tpu_custom_call.1} parent=1 // pred_region
      %s132 = ssub.s32 256, 256
      %133 = vsyncadd [#allocation4], %s132
      %s134 = sshll.u32 [#allocation7], 4
      %s135 = int_to_ptr.vmem [resolvable:$true] %s134
      %140 = dma.vmem_to_hbm [thread:$0]  %s135, 256, %s2, [#allocation4], 128, 128, 8
    $region21: #{tpu_custom_call.1} parent=1 // pred_fallthru
      _
    // Predicated region
    $region22: #{tpu_custom_call.1} parent=1 // pred_check
      _
    $region23: #{tpu_custom_call.1} parent=1 // pred_check_branch
      %142 = sbr.rel (0) target = $region25
    $region24: #{tpu_custom_call.1} parent=1 // pred_region
      %143 = dma.done [#allocation4], 256
    $region25: #{tpu_custom_call.1} parent=1 // pred_fallthru
      _
    %144 = vsyncpa [#allocation3], 1
    %145 = vsyncpa [#allocation6], 1
    %146 = vsyncpa [#allocation4], 1

</llo_original>
